<compile_context>
chip_gen: v7x
topology: tpu7x:2x2x1
jax: 0.10.0
libtpu: 0.0.40
codegen_flags: <defaults>
</compile_context>

<pallas_src>
import functools

import jax
import jax.numpy as jnp
from jax.experimental import pallas as pl
from jax.experimental.pallas import tpu as pltpu


_VMEM_TILE_BUDGET = 24 * 1024 * 1024      # working-set target, safe on v5e/v6e/v7x


def _choose_tiles(batch, n_classes, itemsize, budget=_VMEM_TILE_BUDGET):
    """Pick (tb, tc) batch/class tile sizes for the CE kernel."""
    # bytes per (row, class) element resident in VMEM:
    #   2x double-buffered input tile + ~3x f32 working copies inside the kernel
    per_elem = 2 * itemsize + 3 * 4
    rows_full_c = budget // max(1, n_classes * per_elem)

    if rows_full_c >= batch:
        return batch, n_classes                    # single tile in both dims
    if rows_full_c >= 128:
        tb = min((rows_full_c // 128) * 128, 1024)  # multiple of 128 (lane-dense out)
        return tb, n_classes                        # batch-tiled, full class dim

    # C is large: tile the class dim too (online-logsumexp path).
    tb = batch if batch <= 128 else 128
    tc_fit = budget // max(1, tb * per_elem)
    if tc_fit >= n_classes:
        tc = n_classes
    else:
        tc = max(128, (tc_fit // 128) * 128)        # multiple of 128
        tc = min(tc, n_classes)
    return tb, tc


def _ce_loss_kernel(logits_ref, tgt_ref, loss_ref, m_acc, s_acc, p_acc,
                    *, n_classes, tb, tc, mask_classes):
    """Per-sample cross-entropy with online logsumexp over class tiles."""
    c = pl.program_id(1)

    @pl.when(c == 0)
    def _():
        m_acc[...] = jnp.full_like(m_acc, -jnp.inf)
        s_acc[...] = jnp.zeros_like(s_acc)
        p_acc[...] = jnp.zeros_like(p_acc)

    logits = logits_ref[...].astype(jnp.float32)            # (tb, tc) f32 compute
    tgt = tgt_ref[...]                                      # (tb, 1) int32

    cls = jax.lax.broadcasted_iota(jnp.int32, (tb, tc), 1) + c * tc
    if mask_classes:                                        # static: C % tc != 0
        logits = jnp.where(cls < n_classes, logits, -jnp.inf)

    # logit[target] lives in exactly one class tile -> accumulate the pick
    p_acc[...] += jnp.sum(jnp.where(cls == tgt, logits, 0.0),
                          axis=-1, keepdims=True)

    # online (flash-style) logsumexp over the class axis
    tile_max = jnp.max(logits, axis=-1, keepdims=True)
    m_new = jnp.maximum(m_acc[...], tile_max)
    s_acc[...] = (s_acc[...] * jnp.exp(m_acc[...] - m_new)
                  + jnp.sum(jnp.exp(logits - m_new), axis=-1, keepdims=True))
    m_acc[...] = m_new

    @pl.when(c == pl.num_programs(1) - 1)
    def _():
        # -log_softmax(logits)[target] = m + log(sum exp(logits - m)) - logit[target]
        loss = m_acc[...] + jnp.log(s_acc[...]) - p_acc[...]   # (tb, 1)
        loss_ref[...] = jnp.transpose(loss)                    # lane-dense (1, tb)


def _ousm_reduce_kernel(loss_ref, out_ref, *, batch, k):
    """Mask padded lanes, drop the k largest losses, mean the rest."""
    lanes = loss_ref.shape[-1]
    losses = loss_ref[...]                                   # (1, B_pad) f32
    col = jax.lax.broadcasted_iota(jnp.int32, (1, lanes), 1)
    valid = col < batch                                      # drop padded/garbage rows

    total = jnp.sum(jnp.where(valid, losses, 0.0))
    work = jnp.where(valid, losses, -jnp.inf)

    removed = jnp.float32(0.0)
    for _ in range(k):                                       # static, small k
        mx = jnp.max(work)
        # remove exactly one occurrence of the current max (tie-safe)
        hit = jnp.min(jnp.where(work == mx, col, lanes))
        work = jnp.where(col == hit, -jnp.inf, work)
        removed = removed + mx

    out_ref[0, 0] = (total - removed) / jnp.float32(batch - k)


def ousm_loss(logits, targets, k=2):
    """OUSMLoss.forward: drop the k largest per-sample CE losses, mean the rest."""
    B, C = logits.shape
    if B - k <= 0:
        # PyTorch reference returns None from ousm() and then crashes in torch.mean.
        raise ValueError("OUSMLoss requires batch size > k")

    itemsize = jnp.dtype(logits.dtype).itemsize
    tb, tc = _choose_tiles(B, C, itemsize)
    b_tiles = pl.cdiv(B, tb)
    c_tiles = pl.cdiv(C, tc)
    b_pad = b_tiles * tb

    tgt2d = targets.astype(jnp.int32).reshape(B, 1)

    # VMEM limit: pipelined logits tile + f32 working copies + scratch, with headroom.
    est = 2 * tb * tc * itemsize + 3 * tb * tc * 4 + 4 * tb * 128 * 4
    vmem_limit = int(min(48 * 1024 * 1024, max(32 * 1024 * 1024, est + (8 << 20))))

    ce = functools.partial(_ce_loss_kernel, n_classes=C, tb=tb, tc=tc,
                           mask_classes=(C % tc != 0))
    losses = pl.pallas_call(
        ce,
        out_shape=jax.ShapeDtypeStruct((1, b_pad), jnp.float32),
        grid_spec=pltpu.PrefetchScalarGridSpec(
            num_scalar_prefetch=0,
            grid=(b_tiles, c_tiles),
            in_specs=[
                pl.BlockSpec((tb, tc), lambda b, c: (b, c)),   # logits tile
                pl.BlockSpec((tb, 1), lambda b, c: (b, 0)),    # target-id tile
            ],
            out_specs=pl.BlockSpec((1, tb), lambda b, c: (0, b)),   # lane-dense losses
            scratch_shapes=[pltpu.VMEM((tb, 1), jnp.float32),       # running max
                            pltpu.VMEM((tb, 1), jnp.float32),       # running exp-sum
                            pltpu.VMEM((tb, 1), jnp.float32)],      # picked target logit
        ),
        compiler_params=pltpu.CompilerParams(
            dimension_semantics=("parallel", "arbitrary"),
            vmem_limit_bytes=vmem_limit,
        ),
    )(logits, tgt2d)

    red = functools.partial(_ousm_reduce_kernel, batch=B, k=int(k))
    out = pl.pallas_call(
        red,
        out_shape=jax.ShapeDtypeStruct((1, 1), jnp.float32),
        grid_spec=pltpu.PrefetchScalarGridSpec(
            num_scalar_prefetch=0,
            grid=(1,),
            in_specs=[pl.BlockSpec((1, b_pad), lambda i: (0, 0))],
            out_specs=pl.BlockSpec((1, 1), lambda i: (0, 0)),
        ),
        compiler_params=pltpu.CompilerParams(
            dimension_semantics=("arbitrary",),
        ),
    )(losses)

    return out[0, 0]


def reference_ousm(logits, targets, k):
    """Pure-JAX reference matching the PyTorch ousm()/OUSMLoss forward."""
    logsm = jax.nn.log_softmax(logits.astype(jnp.float32), axis=1)
    losses = -jnp.take_along_axis(logsm, targets.astype(jnp.int32)[:, None], axis=1)[:, 0]
    B = logits.shape[0]
    neg_smallest, _ = jax.lax.top_k(-losses, B - k)     # B-k smallest losses
    return jnp.mean(-neg_smallest)


if __name__ == "__main__":
    key = jax.random.PRNGKey(0)
    k_logits, k_tgt = jax.random.split(key)

    B, C, K = 8, 16, 2                     # small shapes consistent with the module
    logits = jax.random.normal(k_logits, (B, C), dtype=jnp.float32)
    targets = jax.random.randint(k_tgt, (B,), 0, C, dtype=jnp.int32)

    out = ousm_loss(logits, targets, k=K)
    out = jax.block_until_ready(out)

    ref = reference_ousm(logits, targets, K)
    assert out.shape == ()
    assert jnp.allclose(out, ref, atol=1e-5, rtol=1e-5), (out, ref)

    # TODO(synk): the soft (2-D) targets path of soft_cross_entropy_loss is not
    # exercised by OUSMLoss (it casts targets to long); only hard labels here.
    print("KERNEL_OK")
</pallas_src>

<mosaic_0001>
module attributes {stable_mosaic.version = 11 : i64} {
  func.func @_ce_loss_kernel(%arg0: i32, %arg1: i32, %arg2: memref<8x16xf32, #tpu.memory_space<vmem>>, %arg3: memref<8x1xi32, #tpu.memory_space<vmem>>, %arg4: memref<1x8xf32, #tpu.memory_space<vmem>>, %arg5: memref<8x1xf32, #tpu.memory_space<vmem>>, %arg6: memref<8x1xf32, #tpu.memory_space<vmem>>, %arg7: memref<8x1xf32, #tpu.memory_space<vmem>>) attributes {dimension_semantics = [#tpu.dimension_semantics<parallel>, #tpu.dimension_semantics<arbitrary>], iteration_bounds = array<i64: 1, 1>, scalar_prefetch = 0 : i64, scratch_operands = 3 : i64, tpu.core_type = #tpu.core_type<tc>, window_params = [{transform_indices = @transform_0, window_bounds = array<i64: 8, 16>}, {transform_indices = @transform_1, window_bounds = array<i64: 8, 1>}, {transform_indices = @transform_2, window_bounds = array<i64: 1, 8>}]} {
    %c0_i32 = arith.constant 0 : i32
    %0 = arith.cmpi eq, %arg1, %c0_i32 : i32
    %1 = arith.extui %0 : i1 to i32
    %c0_i32_0 = arith.constant 0 : i32
    %2 = arith.cmpi ne, %1, %c0_i32_0 : i32
    scf.if %2 {
      %cst_23 = arith.constant 0xFF800000 : f32
      %38 = vector.broadcast %cst_23 : f32 to vector<8x1xf32>
      %c0_24 = arith.constant 0 : index
      %c0_25 = arith.constant 0 : index
      %39 = vector.load %arg5[%c0_24, %c0_25] : memref<8x1xf32, #tpu.memory_space<vmem>>, vector<8x1xf32>
      tpu.vector_store %arg5[%c0_24, %c0_25], %38 {strides = array<i32>} : memref<8x1xf32, #tpu.memory_space<vmem>>, vector<8x1xf32>,
      %cst_26 = arith.constant 0.000000e+00 : f32
      %40 = vector.broadcast %cst_26 : f32 to vector<8x1xf32>
      %c0_27 = arith.constant 0 : index
      %c0_28 = arith.constant 0 : index
      %41 = vector.load %arg6[%c0_27, %c0_28] : memref<8x1xf32, #tpu.memory_space<vmem>>, vector<8x1xf32>
      tpu.vector_store %arg6[%c0_27, %c0_28], %40 {strides = array<i32>} : memref<8x1xf32, #tpu.memory_space<vmem>>, vector<8x1xf32>,
      %cst_29 = arith.constant 0.000000e+00 : f32
      %42 = vector.broadcast %cst_29 : f32 to vector<8x1xf32>
      %c0_30 = arith.constant 0 : index
      %c0_31 = arith.constant 0 : index
      %43 = vector.load %arg7[%c0_30, %c0_31] : memref<8x1xf32, #tpu.memory_space<vmem>>, vector<8x1xf32>
      tpu.vector_store %arg7[%c0_30, %c0_31], %42 {strides = array<i32>} : memref<8x1xf32, #tpu.memory_space<vmem>>, vector<8x1xf32>,
    } else {
    }
    %c0 = arith.constant 0 : index
    %c0_1 = arith.constant 0 : index
    %3 = vector.load %arg2[%c0, %c0_1] : memref<8x16xf32, #tpu.memory_space<vmem>>, vector<8x16xf32>
    %c0_2 = arith.constant 0 : index
    %c0_3 = arith.constant 0 : index
    %4 = vector.load %arg3[%c0_2, %c0_3] : memref<8x1xi32, #tpu.memory_space<vmem>>, vector<8x1xi32>
    %5 = tpu.iota {dimensions = array<i32: 1>} : vector<8x16xi32>
    %c16_i32 = arith.constant 16 : i32
    %6 = arith.muli %arg1, %c16_i32 : i32
    %7 = vector.broadcast %6 : i32 to vector<8x16xi32>
    %8 = arith.addi %5, %7 : vector<8x16xi32>
    %c0_4 = arith.constant 0 : index
    %c0_5 = arith.constant 0 : index
    %9 = vector.load %arg7[%c0_4, %c0_5] : memref<8x1xf32, #tpu.memory_space<vmem>>, vector<8x1xf32>
    %10 = vector.broadcast %4 : vector<8x1xi32> to vector<8x16xi32>
    %11 = arith.cmpi eq, %8, %10 : vector<8x16xi32>
    %cst = arith.constant 0.000000e+00 : f32
    %12 = vector.broadcast %cst : f32 to vector<8x16xf32>
    %13 = arith.select %11, %3, %12 : vector<8x16xi1>, vector<8x16xf32>
    %cst_6 = arith.constant dense<0.000000e+00> : vector<8xf32>
    %14 = vector.multi_reduction <add>, %13, %cst_6 [1] : vector<8x16xf32> to vector<8xf32>
    %15 = vector.shape_cast %14 : vector<8xf32> to vector<8x1xf32>
    %16 = arith.addf %9, %15 : vector<8x1xf32>
    %c0_7 = arith.constant 0 : index
    %c0_8 = arith.constant 0 : index
    %17 = vector.load %arg7[%c0_7, %c0_8] : memref<8x1xf32, #tpu.memory_space<vmem>>, vector<8x1xf32>
    tpu.vector_store %arg7[%c0_7, %c0_8], %16 {strides = array<i32>} : memref<8x1xf32, #tpu.memory_space<vmem>>, vector<8x1xf32>,
    %cst_9 = arith.constant dense<0xFF800000> : vector<8xf32>
    %18 = vector.multi_reduction <maximumf>, %3, %cst_9 [1] : vector<8x16xf32> to vector<8xf32>
    %19 = vector.shape_cast %18 : vector<8xf32> to vector<8x1xf32>
    %c0_10 = arith.constant 0 : index
    %c0_11 = arith.constant 0 : index
    %20 = vector.load %arg5[%c0_10, %c0_11] : memref<8x1xf32, #tpu.memory_space<vmem>>, vector<8x1xf32>
    %21 = arith.maximumf %20, %19 : vector<8x1xf32>
    %c0_12 = arith.constant 0 : index
    %c0_13 = arith.constant 0 : index
    %22 = vector.load %arg6[%c0_12, %c0_13] : memref<8x1xf32, #tpu.memory_space<vmem>>, vector<8x1xf32>
    %c0_14 = arith.constant 0 : index
    %c0_15 = arith.constant 0 : index
    %23 = vector.load %arg5[%c0_14, %c0_15] : memref<8x1xf32, #tpu.memory_space<vmem>>, vector<8x1xf32>
    %24 = arith.subf %23, %21 : vector<8x1xf32>
    %25 = math.exp %24 : vector<8x1xf32>
    %26 = arith.mulf %22, %25 : vector<8x1xf32>
    %27 = vector.broadcast %21 : vector<8x1xf32> to vector<8x16xf32>
    %28 = arith.subf %3, %27 : vector<8x16xf32>
    %29 = math.exp %28 : vector<8x16xf32>
    %cst_16 = arith.constant dense<0.000000e+00> : vector<8xf32>
    %30 = vector.multi_reduction <add>, %29, %cst_16 [1] : vector<8x16xf32> to vector<8xf32>
    %31 = vector.shape_cast %30 : vector<8xf32> to vector<8x1xf32>
    %32 = arith.addf %26, %31 : vector<8x1xf32>
    %c0_17 = arith.constant 0 : index
    %c0_18 = arith.constant 0 : index
    %33 = vector.load %arg6[%c0_17, %c0_18] : memref<8x1xf32, #tpu.memory_space<vmem>>, vector<8x1xf32>
    tpu.vector_store %arg6[%c0_17, %c0_18], %32 {strides = array<i32>} : memref<8x1xf32, #tpu.memory_space<vmem>>, vector<8x1xf32>,
    %c0_19 = arith.constant 0 : index
    %c0_20 = arith.constant 0 : index
    %34 = vector.load %arg5[%c0_19, %c0_20] : memref<8x1xf32, #tpu.memory_space<vmem>>, vector<8x1xf32>
    tpu.vector_store %arg5[%c0_19, %c0_20], %21 {strides = array<i32>} : memref<8x1xf32, #tpu.memory_space<vmem>>, vector<8x1xf32>,
    %c0_i32_21 = arith.constant 0 : i32
    %35 = arith.cmpi eq, %arg1, %c0_i32_21 : i32
    %36 = arith.extui %35 : i1 to i32
    %c0_i32_22 = arith.constant 0 : i32
    %37 = arith.cmpi ne, %36, %c0_i32_22 : i32
    scf.if %37 {
      %c0_23 = arith.constant 0 : index
      %c0_24 = arith.constant 0 : index
      %38 = vector.load %arg5[%c0_23, %c0_24] : memref<8x1xf32, #tpu.memory_space<vmem>>, vector<8x1xf32>
      %c0_25 = arith.constant 0 : index
      %c0_26 = arith.constant 0 : index
      %39 = vector.load %arg6[%c0_25, %c0_26] : memref<8x1xf32, #tpu.memory_space<vmem>>, vector<8x1xf32>
      %40 = math.log %39 : vector<8x1xf32>
      %41 = arith.addf %38, %40 : vector<8x1xf32>
      %c0_27 = arith.constant 0 : index
      %c0_28 = arith.constant 0 : index
      %42 = vector.load %arg7[%c0_27, %c0_28] : memref<8x1xf32, #tpu.memory_space<vmem>>, vector<8x1xf32>
      %43 = arith.subf %41, %42 : vector<8x1xf32>
      %44 = tpu.transpose %43, [1, 0] : vector<8x1xf32> -> vector<1x8xf32>
      %c0_29 = arith.constant 0 : index
      %c0_30 = arith.constant 0 : index
      %45 = vector.load %arg4[%c0_29, %c0_30] : memref<1x8xf32, #tpu.memory_space<vmem>>, vector<1x8xf32>
      tpu.vector_store %arg4[%c0_29, %c0_30], %44 {strides = array<i32>} : memref<1x8xf32, #tpu.memory_space<vmem>>, vector<1x8xf32>,
    } else {
    }
    return
  }
  func.func @transform_0(%arg0: i32, %arg1: i32) -> (i32, i32) {
    %c0_i32 = arith.constant 0 : i32
    return %arg0, %arg1 : i32, i32
  }
  func.func @transform_1(%arg0: i32, %arg1: i32) -> (i32, i32) {
    %c0_i32 = arith.constant 0 : i32
    %c0_i32_0 = arith.constant 0 : i32
    return %arg0, %c0_i32 : i32, i32
  }
  func.func @transform_2(%arg0: i32, %arg1: i32) -> (i32, i32) {
    %c0_i32 = arith.constant 0 : i32
    %c0_i32_0 = arith.constant 0 : i32
    return %c0_i32, %arg0 : i32, i32
  }
}

</mosaic_0001>

<llo_original>
// kernel: tpu_custom_call.1
$region0: #{tpu_custom_call.1}
  #allocation0 [shape = 'u32[]', space=smem, size = 0x4, offset = 0x4, fixed_abs, tag = 'smem constant byte address 0x4 - core index']
  #allocation1 [shape = 'u32[144,128]{1,0:T(1,128)}', space=vmem, size = 0x12000, scoped, tag = 'internal scratch']
  #allocation2 [shape = 'f32[8,1]{1,0:T(8,128)}', space=vmem, size = 0x1000, scoped, tag = 'scratch operand']
  #allocation3 [shape = 'f32[8,1]{1,0:T(8,128)}', space=vmem, size = 0x1000, scoped, tag = 'scratch operand']
  #allocation4 [shape = 'f32[8,1]{1,0:T(8,128)}', space=vmem, size = 0x1000, scoped, tag = 'scratch operand']
  %s0 = inlined_call_operand.vmem [shape: f32[8,16], index: 0, kind: input, shape index: {}]
  %s1 = inlined_call_operand.vmem [shape: s32[8,1], index: 1, kind: input, shape index: {}]
  %s2 = inlined_call_operand.hbm [shape: f32[1,8], index: 2, kind: output, shape index: {}]
  %s3 = sld [smem:[#allocation0]]
  $region26: #{tpu_custom_call.1} parent=0
    _
  %s5 = ssub.s32 1, %s3
  %s6 = scalar_select 0, %s5, %s3
  $region1: #{tpu_custom_call.1} parent=0
    #allocation5 [shape = 'u8[512]{0}', space=vmem, size = 0x400, scoped, tag = 'output window, operand 0, single buffered']
    #allocation6 [shape = 's32[1]{0}', space=sflag, size = 0x4, scoped, tag = 'scoped memory for tpu_custom_call.1']
    %7 = vsyncpa [#allocation6], 0
    // Predicated region
    $region2: #{tpu_custom_call.1} parent=1 // pred_check
      _
    $region3: #{tpu_custom_call.1} parent=1 // pred_check_branch
      %9 = sbr.rel (0) target = $region5
    $region4: #{tpu_custom_call.1} parent=1 // pred_region
      _
    $region5: #{tpu_custom_call.1} parent=1 // pred_fallthru
      _
    // Predicated region
    $region6: #{tpu_custom_call.1} parent=1 // pred_check
      _
    $region7: #{tpu_custom_call.1} parent=1 // pred_check_branch
      %11 = sbr.rel (0) target = $region9
    $region8: #{tpu_custom_call.1} parent=1 // pred_region
      _
    $region9: #{tpu_custom_call.1} parent=1 // pred_fallthru
      _
    %p12 = scmp.eq.s32.totalorder 0, 0
    // Predicated region
    $region10: #{tpu_custom_call.1} parent=1 // pred_check
      %p13 = pneg %p12
    $region11: #{tpu_custom_call.1} parent=1 // pred_check_branch
      %15 = sbr.rel (%p13) target = $region13
    $region12: #{tpu_custom_call.1} parent=1 // pred_region
      %vm16 = vcmask 7168
      %17 = vst.msk [vmem:[#allocation2] sm:$0xff] %vm16, -inf
      %18 = vst.msk [vmem:[#allocation3] sm:$0xff] %vm16, 0.0
      %19 = vst.msk [vmem:[#allocation4] sm:$0xff] %vm16, 0.0
    $region13: #{tpu_custom_call.1} parent=1 // pred_fallthru
      _
    %v20 = vld [vmem:[%s0] sm:$0xff]
    %v21 = vld [vmem:[%s1] sm:$0xff]
    %v22 = vlaneseq
    %v23 = vand.u32 %v22, 127
    %s24 = smul.u32 0, 16
    %v25 = vstv %s24
    %v26 = vadd.s32 %v23, %v25
    %v27 = vld [vmem:[#allocation4] sm:$0xff]
    %28 = vset.pattern.permute.xlu0 0
    %29 = vperm.xlu0 %28, %v21
    %v30 = vpop.permute.xlu0 %29
    %vm31 = vcmp.eq.s32.totalorder %v26, %v30
    %v32 = vsel %vm31, %v20, 0.0
    %vm33 = vcmask 130048
    %v34 = vsel %vm33, %v32, 0.0
    %35 = vadd.xlane.f32.xlu0 %v34
    %v36 = vpop.xlane.xlu0 %35
    %v37 = vadd.f32 %v27, %v36
    %vm38 = vcmask 7168
    %39 = vst.msk [vmem:[#allocation4] sm:$0xff] %vm38, %v37
    %v40 = vsel %vm33, %v20, -inf
    %41 = vmax.xlane.f32.xlu0 %v40
    %v42 = vpop.xlane.xlu0 %41
    %v43 = vld [vmem:[#allocation2] sm:$0xff]
    %v44 = vmax.f32 %v43, %v42
    %v45 = vld [vmem:[#allocation3] sm:$0xff]
    %v46 = vsub.f32 %v43, %v44
    %v47 = vmul.f32 %v46, 1.442695
    %v48 = vpow.pop %v47
    %v49 = vmul.f32 %v45, %v48
    %51 = vset.pattern.permute.xlu0 0
    %52 = vperm.xlu0 %51, %v44
    %v53 = vpop.permute.xlu0 %52
    %v55 = vsub.f32 %v20, %v53
    %v56 = vmul.f32 %v55, 1.442695
    %v57 = vpow.pop %v56
    %v58 = vsel %vm33, %v57, 0.0
    %59 = vadd.xlane.f32.xlu0 %v58
    %v60 = vpop.xlane.xlu0 %59
    %v61 = vadd.f32 %v49, %v60
    %62 = vst.msk [vmem:[#allocation3] sm:$0xff] %vm38, %v61
    %63 = vst.msk [vmem:[#allocation2] sm:$0xff] %vm38, %v44
    // Predicated region
    $region14: #{tpu_custom_call.1} parent=1 // pred_check
      %p64 = pneg %p12
    $region15: #{tpu_custom_call.1} parent=1 // pred_check_branch
      %66 = sbr.rel (%p64) target = $region17
    $region16: #{tpu_custom_call.1} parent=1 // pred_region
      %v67 = vld [vmem:[#allocation2] sm:$0xff]
      %v68 = vld [vmem:[#allocation3] sm:$0xff]
      %v69 = vlog2.pop %v68
      %v70 = vmul.f32 %v69, 0.6931472
      %v71 = vadd.f32 %v67, %v70
      %v72 = vld [vmem:[#allocation4] sm:$0xff]
      %v73 = vsub.f32 %v71, %v72
      %74 = vxpose.xlu0.b32.start [1/16] %v73, 128
      %75 = vxpose.xlu0.b32.cont [2/16] 0.0, 128
      %76 = vxpose.xlu0.b32.cont [3/16] 0.0, 128
      %77 = vxpose.xlu0.b32.cont [4/16] 0.0, 128
      %78 = vxpose.xlu0.b32.cont [5/16] 0.0, 128
      %79 = vxpose.xlu0.b32.cont [6/16] 0.0, 128
      %80 = vxpose.xlu0.b32.cont [7/16] 0.0, 128
      %81 = vxpose.xlu0.b32.cont [8/16] 0.0, 128
      %82 = vxpose.xlu0.b32.cont [9/16] 0.0, 128
      %83 = vxpose.xlu0.b32.cont [10/16] 0.0, 128
      %84 = vxpose.xlu0.b32.cont [11/16] 0.0, 128
      %85 = vxpose.xlu0.b32.cont [12/16] 0.0, 128
      %86 = vxpose.xlu0.b32.cont [13/16] 0.0, 128
      %87 = vxpose.xlu0.b32.cont [14/16] 0.0, 128
      %88 = vxpose.xlu0.b32.cont [15/16] 0.0, 128
      %89 = vxpose.xlu0.b32.end [16/16] 0.0, 128
      %v90 = vpop.trf.xlu0
      %v91 = vpop.trf.xlu0
      %v92 = vpop.trf.xlu0
      %v93 = vpop.trf.xlu0
      %v94 = vpop.trf.xlu0
      %v95 = vpop.trf.xlu0
      %v96 = vpop.trf.xlu0
      %v97 = vpop.trf.xlu0
      %v98 = vpop.trf.xlu0
      %v99 = vpop.trf.xlu0
      %v100 = vpop.trf.xlu0
      %v101 = vpop.trf.xlu0
      %v102 = vpop.trf.xlu0
      %v103 = vpop.trf.xlu0
      %v104 = vpop.trf.xlu0
      %v105 = vpop.trf.xlu0
      %vm106 = vcmask 57344
      %107 = vst.msk [vmem:[#allocation5] sm:$0x1] %vm106, %v90
    $region17: #{tpu_custom_call.1} parent=1 // pred_fallthru
      _
    // Predicated region
    $region18: #{tpu_custom_call.1} parent=1 // pred_check
      _
    $region19: #{tpu_custom_call.1} parent=1 // pred_check_branch
      %109 = sbr.rel (0) target = $region21
    $region20: #{tpu_custom_call.1} parent=1 // pred_region
      %s111 = ssub.s32 16, 16
      %112 = vsyncadd [#allocation6], %s111
      %s114 = sshll.u32 [#allocation5], 4
      %s115 = int_to_ptr.vmem [resolvable:$true] %s114
      %117 = dma.vmem_to_hbm [thread:$0]  %s115, 16, %s2, [#allocation6]
    $region21: #{tpu_custom_call.1} parent=1 // pred_fallthru
      _
    // Predicated region
    $region22: #{tpu_custom_call.1} parent=1 // pred_check
      _
    $region23: #{tpu_custom_call.1} parent=1 // pred_check_branch
      %119 = sbr.rel (0) target = $region25
    $region24: #{tpu_custom_call.1} parent=1 // pred_region
      %120 = dma.done [#allocation6], 16
    $region25: #{tpu_custom_call.1} parent=1 // pred_fallthru
      _
    %121 = vsyncpa [#allocation6], 1

</llo_original>
